<compile_context>
chip_gen: v7x
topology: tpu7x:2x2x1
jax: 0.10.0
libtpu: 0.0.40
codegen_flags: <defaults>
</compile_context>

<pallas_src>
import functools
import math

import jax
import jax.numpy as jnp
from jax.experimental import pallas as pl
from jax.experimental.pallas import tpu as pltpu


def _gelu_tanh(x):
    # matches torch.nn.GELU(approximate='tanh'); stays in x.dtype (weak-typed consts)
    c = math.sqrt(2.0 / math.pi)
    return 0.5 * x * (1.0 + jnp.tanh(c * (x + 0.044715 * x * x * x)))


# ---------------------------------------------------------------------------
# Kernel
# ---------------------------------------------------------------------------
def _mlp_kernel(x_ref, wfc_ref, bfc_ref, wpr_ref, bpr_ref, o_ref, xbf_ref, *,
                gelu_dtype):
    j = pl.program_id(1)

    @pl.when(j == 0)
    def _init():
        # Cache the bf16 MXU copy of this row tile once; reused for every hidden chunk.
        xbf_ref[...] = x_ref[...].astype(jnp.bfloat16)
        # Seed the resident f32 output block with the projection bias (no finalize add).
        o_ref[...] = jnp.broadcast_to(bpr_ref[...], o_ref.shape)

    h = jnp.dot(xbf_ref[...], wfc_ref[...],
                preferred_element_type=jnp.float32)          # (TM, TH) f32 from MXU
    h = (h + bfc_ref[...]).astype(gelu_dtype)                # bias add, then GELU
    h = _gelu_tanh(h)                                        # tanh -> EUP slot
    o_ref[...] += jnp.dot(h.astype(jnp.bfloat16), wpr_ref[...],
                          preferred_element_type=jnp.float32)  # (TM, C) partial


# ---------------------------------------------------------------------------
# Wrapper helpers
# ---------------------------------------------------------------------------
def _round_up(x, q):
    return ((x + q - 1) // q) * q


def _pick_divisor_tile(dim, pref, quantum):
    """Largest tile <= pref that divides `dim` and is a multiple of `quantum`;
    falls back to the full dim (always a legal block shape)."""
    if dim <= pref:
        return dim
    t = (pref // quantum) * quantum
    while t >= quantum:
        if dim % t == 0:
            return t
        t -= quantum
    return dim


def _vmem_bytes(TM, TH, C, H):
    """Conservative per-step VMEM working set (double-buffered tiles + temporaries)."""
    return (2 * TM * C * 4        # x row tiles (f32, double-buffered)
            + TM * C * 2          # cached bf16 x tile (scratch)
            + 2 * C * TH * 2      # w_fc chunk (bf16, double-buffered)
            + 2 * TH * 4          # b_fc chunk
            + 2 * TH * C * 2      # w_pr chunk (bf16, double-buffered)
            + 2 * C * 4           # b_pr
            + 2 * TM * C * 4      # output / accumulator tiles (f32, double-buffered)
            + 2 * TM * TH * 4)    # (TM, TH) elementwise intermediates


def _vmem_capacity_bytes():
    try:
        return int(pltpu.get_tpu_info().vmem_capacity_bytes)
    except Exception:
        return 64 * 2 ** 20       # conservative: v7x per-TC VMEM


def _vpu_has_bf16():
    # v6e / v7x VPU+EUP are bf16 capable; v5e and older are not.
    try:
        kind = jax.devices()[0].device_kind.lower()
        return not any(t in kind for t in ("v2", "v3", "v4", "v5"))
    except Exception:
        return False              # safe default: f32 GELU


# ---------------------------------------------------------------------------
# Public entry point
# ---------------------------------------------------------------------------
def mlp_pallas(x, w_fc, b_fc, w_pr, b_pr, *, tm=None, th=None, gelu_in_bf16=None):
    """GPT-2 MLP forward: gelu_tanh(x @ w_fc + b_fc) @ w_pr + b_pr.

    x: (..., C).  Weights should be pre-cast to bf16 (see init_params) so the
    per-call HBM conversion pass is avoided; f32 weights are accepted and cast once.
    """
    orig_shape = x.shape
    C = int(orig_shape[-1])
    H = int(w_fc.shape[-1])
    M = int(x.size // C)
    x2d = x.reshape(M, C).astype(jnp.float32)

    # ---- chip-aware knobs ----------------------------------------------------
    vmem_cap = _vmem_capacity_bytes()
    # Leave headroom for compiler internal scratch (v7x: ~46 MiB of 64 MiB).
    vmem_budget = min(int(0.72 * vmem_cap), 96 * 2 ** 20)
    if gelu_in_bf16 is None:
        gelu_in_bf16 = _vpu_has_bf16()
    gelu_dtype = jnp.bfloat16 if gelu_in_bf16 else jnp.float32

    # ---- row tile: big for arithmetic intensity, but keep >= 2 row tiles so the
    # "parallel" axis can occupy both v7x TensorCores. ---------------------------
    q_m = 8
    pref_tm = 1024 if tm is None else int(tm)
    Mq = _round_up(max(M, 1), q_m)
    if Mq <= q_m:
        TM = q_m
    else:
        TM = max(q_m, min(pref_tm, _round_up((Mq + 1) // 2, q_m)))

    # ---- hidden tile: full bf16 weight residency when it fits (weights DMAed once
    # for the whole call); otherwise chunk along H. ------------------------------
    if th is not None:
        TH = _pick_divisor_tile(H, int(th), 128)
    else:
        TH = H
        if _vmem_bytes(TM, TH, C, H) > vmem_budget:
            for pref_th in (1024, 512, 256):
                TH = _pick_divisor_tile(H, pref_th, 128)
                if _vmem_bytes(TM, TH, C, H) <= vmem_budget:
                    break
    # Last resort: shrink the row tile until the working set fits.
    while _vmem_bytes(TM, TH, C, H) > vmem_budget and TM > q_m:
        TM = max(q_m, _round_up(TM // 2, q_m))

    # ---- pad rows so TM always divides (no full-dim fallback / masking needed). -
    M_pad = _round_up(M, TM)
    if M_pad != M:
        x2d = jnp.pad(x2d, ((0, M_pad - M), (0, 0)))

    grid = (M_pad // TM, H // TH)

    # bf16 MXU weights (no-op if the caller already passes bf16); biases stay f32.
    wfc_b = w_fc if w_fc.dtype == jnp.bfloat16 else w_fc.astype(jnp.bfloat16)
    wpr_b = w_pr if w_pr.dtype == jnp.bfloat16 else w_pr.astype(jnp.bfloat16)
    bfc2d = b_fc.reshape(1, H).astype(jnp.float32)
    bpr2d = b_pr.reshape(1, C).astype(jnp.float32)

    vmem_est = _vmem_bytes(TM, TH, C, H)
    vmem_limit = int(min(max(vmem_budget, int(1.2 * vmem_est)), int(0.9 * vmem_cap)))

    weight_passes = 1 if TH == H else (M_pad // TM)
    cost = pl.CostEstimate(
        flops=int(4 * M_pad * C * H),                     # two matmuls
        transcendentals=int(M_pad * H),                   # tanh inside GELU
        bytes_accessed=int(M_pad * C * 4 + M_pad * C * 4  # x in, out
                           + 4 * C * H * weight_passes    # bf16 weights
                           + 4 * (H + C)),                # biases
    )

    grid_spec = pltpu.PrefetchScalarGridSpec(
        num_scalar_prefetch=0,
        grid=grid,
        in_specs=[
            pl.BlockSpec((TM, C), lambda i, j: (i, 0)),   # x row tile (fetched once per i)
            pl.BlockSpec((C, TH), lambda i, j: (0, j)),   # w_fc chunk (constant if TH == H)
            pl.BlockSpec((1, TH), lambda i, j: (0, j)),   # b_fc chunk
            pl.BlockSpec((TH, C), lambda i, j: (j, 0)),   # w_pr chunk (constant if TH == H)
            pl.BlockSpec((1, C), lambda i, j: (0, 0)),    # b_pr
        ],
        out_specs=pl.BlockSpec((TM, C), lambda i, j: (i, 0)),   # resident f32 accumulator
        scratch_shapes=[pltpu.VMEM((TM, C), jnp.bfloat16)],     # cached bf16 x tile
    )

    out2d = pl.pallas_call(
        functools.partial(_mlp_kernel, gelu_dtype=gelu_dtype),
        out_shape=jax.ShapeDtypeStruct((M_pad, C), jnp.float32),
        grid_spec=grid_spec,
        compiler_params=pltpu.CompilerParams(
            dimension_semantics=("parallel", "arbitrary"),
            vmem_limit_bytes=vmem_limit,
        ),
        cost_estimate=cost,
    )(x2d, wfc_b, bfc2d, wpr_b, bpr2d)

    if M_pad != M:
        out2d = out2d[:M]
    return out2d.reshape(orig_shape)


# ---------------------------------------------------------------------------
# Reference, params, tests
# ---------------------------------------------------------------------------
def mlp_ref(x, w_fc, b_fc, w_pr, b_pr):
    """Pure-JAX f32 reference mirroring the PyTorch MLP.forward."""
    h = _gelu_tanh(x @ w_fc.astype(jnp.float32) + b_fc)
    return h @ w_pr.astype(jnp.float32) + b_pr


def init_params(key, C):
    """Deterministic synthetic init matching MLP.__init__ shapes.
    Weights are stored bf16 once here (hoisted out of the per-call path).
    (NANOGPT_SCALE_INIT is an init-time attribute only; no forward-pass effect.)"""
    ks = jax.random.split(key, 4)
    s = 0.02
    return {
        'w_fc': (s * jax.random.normal(ks[0], (C, 4 * C))).astype(jnp.bfloat16),
        'b_fc': (s * jax.random.normal(ks[1], (4 * C,))).astype(jnp.float32),
        'w_pr': (s * jax.random.normal(ks[2], (4 * C, C))).astype(jnp.bfloat16),
        'b_pr': (s * jax.random.normal(ks[3], (C,))).astype(jnp.float32),
    }


def _check(B, T, C, key, **kw):
    kx, kp = jax.random.split(key)
    x = jax.random.normal(kx, (B, T, C), dtype=jnp.float32)
    p = init_params(kp, C)

    out = mlp_pallas(x, p['w_fc'], p['b_fc'], p['w_pr'], p['b_pr'], **kw)
    out = jax.block_until_ready(out)

    ref = mlp_ref(x, p['w_fc'], p['b_fc'], p['w_pr'], p['b_pr'])
    err = float(jnp.max(jnp.abs(out - ref)))
    assert out.shape == (B, T, C)
    # bf16 MXU operands / bf16 GELU -> tolerance loosened vs the f32 reference.
    assert jnp.allclose(out, ref, atol=1e-2, rtol=1e-2), f"max abs err {err}"
    return err


if __name__ == "__main__":
    key = jax.random.PRNGKey(0)
    k1, k2, k3 = jax.random.split(key, 3)

    # Small shape implied by the spec (seq=8, hidden=32); 2 row tiles, resident weights.
    _check(B=2, T=8, C=32, key=k1)
    # Larger shape: exercises the weight-resident path with multiple row tiles.
    _check(B=2, T=256, C=256, key=k2)
    # Odd M (row padding) + forced hidden chunking: exercises the accumulate path
    # and the cached bf16 x-tile reuse across hidden chunks.
    _check(B=3, T=7, C=128, key=k3, th=128)

    print("KERNEL_OK")
</pallas_src>

<mosaic_0001>
module attributes {stable_mosaic.version = 11 : i64} {
  func.func @_mlp_kernel(%arg0: i32, %arg1: i32, %arg2: memref<8x32xf32, #tpu.memory_space<vmem>>, %arg3: memref<32x128xbf16, #tpu.memory_space<vmem>>, %arg4: memref<1x128xf32, #tpu.memory_space<vmem>>, %arg5: memref<128x32xbf16, #tpu.memory_space<vmem>>, %arg6: memref<1x32xf32, #tpu.memory_space<vmem>>, %arg7: memref<8x32xf32, #tpu.memory_space<vmem>>, %arg8: memref<8x32xbf16, #tpu.memory_space<vmem>>) attributes {dimension_semantics = [#tpu.dimension_semantics<parallel>, #tpu.dimension_semantics<arbitrary>], iteration_bounds = array<i64: 2, 1>, scalar_prefetch = 0 : i64, scratch_operands = 1 : i64, tpu.core_type = #tpu.core_type<tc>, window_params = [{transform_indices = @transform_0, window_bounds = array<i64: 8, 32>}, {transform_indices = @transform_1, window_bounds = array<i64: 32, 128>}, {transform_indices = @transform_2, window_bounds = array<i64: 1, 128>}, {transform_indices = @transform_3, window_bounds = array<i64: 128, 32>}, {pipeline_mode = #tpu.pipeline_mode<synchronous>, transform_indices = @transform_4, window_bounds = array<i64: 1, 32>}, {transform_indices = @transform_5, window_bounds = array<i64: 8, 32>}]} {
    %c0_i32 = arith.constant 0 : i32
    %0 = arith.cmpi eq, %arg1, %c0_i32 : i32
    %1 = arith.extui %0 : i1 to i32
    %c0_i32_0 = arith.constant 0 : i32
    %2 = arith.cmpi ne, %1, %c0_i32_0 : i32
    scf.if %2 {
      %c0_17 = arith.constant 0 : index
      %c0_18 = arith.constant 0 : index
      %28 = vector.load %arg2[%c0_17, %c0_18] : memref<8x32xf32, #tpu.memory_space<vmem>>, vector<8x32xf32>
      %29 = arith.truncf %28 : vector<8x32xf32> to vector<8x32xbf16>
      %c0_19 = arith.constant 0 : index
      %c0_20 = arith.constant 0 : index
      %30 = vector.load %arg8[%c0_19, %c0_20] : memref<8x32xbf16, #tpu.memory_space<vmem>>, vector<8x32xbf16>
      tpu.vector_store %arg8[%c0_19, %c0_20], %29 {strides = array<i32>} : memref<8x32xbf16, #tpu.memory_space<vmem>>, vector<8x32xbf16>,
      %c0_21 = arith.constant 0 : index
      %c0_22 = arith.constant 0 : index
      %31 = vector.load %arg6[%c0_21, %c0_22] : memref<1x32xf32, #tpu.memory_space<vmem>>, vector<1x32xf32>
      %32 = vector.shape_cast %31 : vector<1x32xf32> to vector<1x32xf32>
      %33 = vector.broadcast %32 : vector<1x32xf32> to vector<8x32xf32>
      %c0_23 = arith.constant 0 : index
      %c0_24 = arith.constant 0 : index
      %34 = vector.load %arg7[%c0_23, %c0_24] : memref<8x32xf32, #tpu.memory_space<vmem>>, vector<8x32xf32>
      tpu.vector_store %arg7[%c0_23, %c0_24], %33 {strides = array<i32>} : memref<8x32xf32, #tpu.memory_space<vmem>>, vector<8x32xf32>,
    } else {
    }
    %c0 = arith.constant 0 : index
    %c0_1 = arith.constant 0 : index
    %3 = vector.load %arg8[%c0, %c0_1] : memref<8x32xbf16, #tpu.memory_space<vmem>>, vector<8x32xbf16>
    %c0_2 = arith.constant 0 : index
    %c0_3 = arith.constant 0 : index
    %4 = vector.load %arg3[%c0_2, %c0_3] : memref<32x128xbf16, #tpu.memory_space<vmem>>, vector<32x128xbf16>
    %cst = arith.constant dense<0.000000e+00> : vector<8x128xf32>
    %5 = tpu.matmul %3, %4, %cst {dimension_numbers = #tpu.dot_dimension_numbers<[1], [0], [0], [1], [0, 0, 1, 1], [], []>} : vector<8x32xbf16>, vector<32x128xbf16>, vector<8x128xf32> -> vector<8x128xf32>
    %c0_4 = arith.constant 0 : index
    %c0_5 = arith.constant 0 : index
    %6 = vector.load %arg4[%c0_4, %c0_5] : memref<1x128xf32, #tpu.memory_space<vmem>>, vector<1x128xf32>
    %7 = vector.broadcast %6 : vector<1x128xf32> to vector<8x128xf32>
    %8 = arith.addf %5, %7 : vector<8x128xf32>
    %9 = arith.truncf %8 : vector<8x128xf32> to vector<8x128xbf16>
    %cst_6 = arith.constant 5.000000e-01 : bf16
    %10 = vector.broadcast %cst_6 : bf16 to vector<8x128xbf16>
    %11 = arith.mulf %10, %9 : vector<8x128xbf16>
    %cst_7 = arith.constant 4.467770e-02 : bf16
    %12 = vector.broadcast %cst_7 : bf16 to vector<8x128xbf16>
    %13 = arith.mulf %12, %9 : vector<8x128xbf16>
    %14 = arith.mulf %13, %9 : vector<8x128xbf16>
    %15 = arith.mulf %14, %9 : vector<8x128xbf16>
    %16 = arith.addf %9, %15 : vector<8x128xbf16>
    %cst_8 = arith.constant 7.968750e-01 : bf16
    %17 = vector.broadcast %cst_8 : bf16 to vector<8x128xbf16>
    %18 = arith.mulf %17, %16 : vector<8x128xbf16>
    %19 = math.tanh %18 : vector<8x128xbf16>
    %cst_9 = arith.constant 1.000000e+00 : bf16
    %20 = vector.broadcast %cst_9 : bf16 to vector<8x128xbf16>
    %21 = arith.addf %20, %19 : vector<8x128xbf16>
    %22 = arith.mulf %11, %21 : vector<8x128xbf16>
    %c0_10 = arith.constant 0 : index
    %c0_11 = arith.constant 0 : index
    %23 = vector.load %arg7[%c0_10, %c0_11] : memref<8x32xf32, #tpu.memory_space<vmem>>, vector<8x32xf32>
    %c0_12 = arith.constant 0 : index
    %c0_13 = arith.constant 0 : index
    %24 = vector.load %arg5[%c0_12, %c0_13] : memref<128x32xbf16, #tpu.memory_space<vmem>>, vector<128x32xbf16>
    %cst_14 = arith.constant dense<0.000000e+00> : vector<8x32xf32>
    %25 = tpu.matmul %22, %24, %cst_14 {dimension_numbers = #tpu.dot_dimension_numbers<[1], [0], [0], [1], [0, 0, 1, 1], [], []>} : vector<8x128xbf16>, vector<128x32xbf16>, vector<8x32xf32> -> vector<8x32xf32>
    %26 = arith.addf %23, %25 : vector<8x32xf32>
    %c0_15 = arith.constant 0 : index
    %c0_16 = arith.constant 0 : index
    %27 = vector.load %arg7[%c0_15, %c0_16] : memref<8x32xf32, #tpu.memory_space<vmem>>, vector<8x32xf32>
    tpu.vector_store %arg7[%c0_15, %c0_16], %26 {strides = array<i32>} : memref<8x32xf32, #tpu.memory_space<vmem>>, vector<8x32xf32>,
    return
  }
  func.func @transform_0(%arg0: i32, %arg1: i32) -> (i32, i32) {
    %c0_i32 = arith.constant 0 : i32
    %c0_i32_0 = arith.constant 0 : i32
    return %arg0, %c0_i32 : i32, i32
  }
  func.func @transform_1(%arg0: i32, %arg1: i32) -> (i32, i32) {
    %c0_i32 = arith.constant 0 : i32
    %c0_i32_0 = arith.constant 0 : i32
    return %c0_i32, %arg1 : i32, i32
  }
  func.func @transform_2(%arg0: i32, %arg1: i32) -> (i32, i32) {
    %c0_i32 = arith.constant 0 : i32
    %c0_i32_0 = arith.constant 0 : i32
    return %c0_i32, %arg1 : i32, i32
  }
  func.func @transform_3(%arg0: i32, %arg1: i32) -> (i32, i32) {
    %c0_i32 = arith.constant 0 : i32
    %c0_i32_0 = arith.constant 0 : i32
    return %arg1, %c0_i32 : i32, i32
  }
  func.func @transform_4(%arg0: i32, %arg1: i32) -> (i32, i32) {
    %c0_i32 = arith.constant 0 : i32
    %c0_i32_0 = arith.constant 0 : i32
    %c0_i32_1 = arith.constant 0 : i32
    return %c0_i32, %c0_i32_0 : i32, i32
  }
  func.func @transform_5(%arg0: i32, %arg1: i32) -> (i32, i32) {
    %c0_i32 = arith.constant 0 : i32
    %c0_i32_0 = arith.constant 0 : i32
    return %arg0, %c0_i32 : i32, i32
  }
}

</mosaic_0001>

<llo_original>
// kernel: tpu_custom_call.1
$region0: #{tpu_custom_call.1}
  #allocation0 [shape = 'u32[]', space=smem, size = 0x4, offset = 0x4, fixed_abs, tag = 'smem constant byte address 0x4 - core index']
  #allocation1 [shape = 'u32[144,128]{1,0:T(1,128)}', space=vmem, size = 0x12000, scoped, tag = 'internal scratch']
  #allocation2 [shape = 'bf16[8,32]{1,0:T(8,128)(2,1)}', space=vmem, size = 0x800, scoped, tag = 'scratch operand']
  %s0 = inlined_call_operand.vmem [shape: f32[16,32], index: 0, kind: input, shape index: {}]
  %s1 = inlined_call_operand.vmem [shape: bf16[32,128], index: 1, kind: input, shape index: {}]
  %s2 = inlined_call_operand.vmem [shape: f32[1,128], index: 2, kind: input, shape index: {}]
  %s3 = inlined_call_operand.vmem [shape: bf16[128,32], index: 3, kind: input, shape index: {}]
  %s4 = inlined_call_operand.vmem [shape: f32[1,32], index: 4, kind: input, shape index: {}]
  %s5 = inlined_call_operand.hbm [shape: f32[16,32], index: 5, kind: output, shape index: {}]
  %s6 = sld [smem:[#allocation0]]
  $region57: #{tpu_custom_call.1} parent=0
    _
  %s8 = ssub.s32 1, %s6
  %s9 = scalar_select 0, %s8, %s6
  $region1: #{tpu_custom_call.1} parent=0
    #allocation3 [shape = 'u8[8192]{0}', space=vmem, size = 0x2000, scoped, tag = 'output window, operand 0']
    #allocation4 [shape = 's32[2]{0}', space=sflag, size = 0x8, scoped, tag = 'scoped memory for tpu_custom_call.1']
    %10 = vsyncpa [#allocation4], 0
    %s11 = scalar_lea.sflag [#allocation4], 1
    %12 = vsyncpa %s11, 0
    loop: start=0, step=1, limit=4
    $region2: #{tpu_custom_call.1} parent=1 // loop_pre_header
      _
    $region3: #{tpu_custom_call.1} parent=1 // loop_header
      %s14 = sphi 0, %s18
      %p15 = scmp.ge.s32.totalorder %s14, 4
      %s21 = sphi 0, %s33
      %s22 = sphi 0, %s29
      %s23 = sphi 0, %s21
      %s24 = sphi 0, %s22
      %s25 = sphi 0, %s23
      %s26 = sphi 0, %s24
      %s36 = sphi 0, %s38
      %s39 = sphi 0, %s36
      %s40 = sphi 0, %s39
      %s56 = sphi 0, %s40
      %s62 = sphi 0, %s64
      %s65 = sphi 0, %s62
      %s66 = sphi 0, %s65
      %s82 = sphi 0, %s66
      %s88 = sphi 0, %s90
      %s91 = sphi 0, %s88
      %s92 = sphi 0, %s91
      %s108 = sphi 0, %s92
      %s114 = sphi 0, %s116
      %s117 = sphi 0, %s114
      %s118 = sphi 0, %s117
      %s134 = sphi 0, %s118
      %s138 = sphi 0, %s138
      %s140 = sphi 0, %s138
      %s141 = sphi 0, %s140
      %s155 = sphi 0, %s141
      %s161 = sphi 0, %s163
      %s164 = sphi 0, %s161
      %s165 = sphi 0, %s164
      %s181 = sphi 0, %s165
    $region4: #{tpu_custom_call.1} parent=1 // loop_header_branch
      %17 = sbr.rel (%p15) target = $region8
    $region5: #{tpu_custom_call.1} parent=1 // loop_body
      %s19 = ssub.s32 %s14, 1
      %s20 = ssub.s32 %s14, 2
      %s27 = sadd.s32 1, %s22
      %p28 = scmp.ge.s32.totalorder %s27, 1
      %s29 = scalar_select %p28, 0, %s27
      %s30 = sadd.s32 1, %s21
      %s31 = scalar_select %p28, %s30, %s21
      %p32 = scmp.ge.s32.totalorder %s31, 2
      %s33 = scalar_select %p32, 0, %s31
      %s34 = ssub.s32 %s21, %s33
      %p35 = scmp.eq.s32.totalorder %s34, 0
      %s37 = sadd.s32 %s36, 1
      %s38 = scalar_select %p35, %s36, %s37
      %p41 = pneg %p35
      %p42 = scmp.eq.s32.totalorder %s14, 1
      %p43 = por %p41, %p42
      %p44 = scmp.ne.s32.totalorder %s36, %s39
      %p45 = scmp.eq.s32.totalorder %s14, 0
      %p46 = por %p44, %p45
      %p47 = scmp.ne.s32.totalorder %s36, %s39
      %p48 = scmp.eq.s32.totalorder %s19, 1
      %p49 = por %p47, %p48
      %p50 = scmp.ne.s32.totalorder %s39, %s40
      %p51 = scmp.eq.s32.totalorder %s19, 0
      %p52 = por %p50, %p51
      %p53 = scmp.ne.s32.totalorder %s39, %s40
      %p54 = scmp.eq.s32.totalorder %s20, 1
      %p55 = por %p53, %p54
      %p57 = scmp.ne.s32.totalorder %s40, %s56
      %p58 = scmp.eq.s32.totalorder %s20, 0
      %p59 = por %p57, %p58
      %s60 = ssub.s32 %s22, %s29
      %p61 = scmp.eq.s32.totalorder %s60, 0
      %s63 = sadd.s32 %s62, 1
      %s64 = scalar_select %p61, %s62, %s63
      %p67 = pneg %p61
      %p68 = scmp.eq.s32.totalorder %s14, 1
      %p69 = por %p67, %p68
      %p70 = scmp.ne.s32.totalorder %s62, %s65
      %p71 = scmp.eq.s32.totalorder %s14, 0
      %p72 = por %p70, %p71
      %p73 = scmp.ne.s32.totalorder %s62, %s65
      %p74 = scmp.eq.s32.totalorder %s19, 1
      %p75 = por %p73, %p74
      %p76 = scmp.ne.s32.totalorder %s65, %s66
      %p77 = scmp.eq.s32.totalorder %s19, 0
      %p78 = por %p76, %p77
      %p79 = scmp.ne.s32.totalorder %s65, %s66
      %p80 = scmp.eq.s32.totalorder %s20, 1
      %p81 = por %p79, %p80
      %p83 = scmp.ne.s32.totalorder %s66, %s82
      %p84 = scmp.eq.s32.totalorder %s20, 0
      %p85 = por %p83, %p84
      %s86 = ssub.s32 %s22, %s29
      %p87 = scmp.eq.s32.totalorder %s86, 0
      %s89 = sadd.s32 %s88, 1
      %s90 = scalar_select %p87, %s88, %s89
      %p93 = pneg %p87
      %p94 = scmp.eq.s32.totalorder %s14, 1
      %p95 = por %p93, %p94
      %p96 = scmp.ne.s32.totalorder %s88, %s91
      %p97 = scmp.eq.s32.totalorder %s14, 0
      %p98 = por %p96, %p97
      %p99 = scmp.ne.s32.totalorder %s88, %s91
      %p100 = scmp.eq.s32.totalorder %s19, 1
      %p101 = por %p99, %p100
      %p102 = scmp.ne.s32.totalorder %s91, %s92
      %p103 = scmp.eq.s32.totalorder %s19, 0
      %p104 = por %p102, %p103
      %p105 = scmp.ne.s32.totalorder %s91, %s92
      %p106 = scmp.eq.s32.totalorder %s20, 1
      %p107 = por %p105, %p106
      %p109 = scmp.ne.s32.totalorder %s92, %s108
      %p110 = scmp.eq.s32.totalorder %s20, 0
      %p111 = por %p109, %p110
      %s112 = ssub.s32 %s22, %s29
      %p113 = scmp.eq.s32.totalorder %s112, 0
      %s115 = sadd.s32 %s114, 1
      %s116 = scalar_select %p113, %s114, %s115
      %p119 = pneg %p113
      %p120 = scmp.eq.s32.totalorder %s14, 1
      %p121 = por %p119, %p120
      %p122 = scmp.ne.s32.totalorder %s114, %s117
      %p123 = scmp.eq.s32.totalorder %s14, 0
      %p124 = por %p122, %p123
      %p125 = scmp.ne.s32.totalorder %s114, %s117
      %p126 = scmp.eq.s32.totalorder %s19, 1
      %p127 = por %p125, %p126
      %p128 = scmp.ne.s32.totalorder %s117, %s118
      %p129 = scmp.eq.s32.totalorder %s19, 0
      %p130 = por %p128, %p129
      %p131 = scmp.ne.s32.totalorder %s117, %s118
      %p132 = scmp.eq.s32.totalorder %s20, 1
      %p133 = por %p131, %p132
      %p135 = scmp.ne.s32.totalorder %s118, %s134
      %p136 = scmp.eq.s32.totalorder %s20, 0
      %p137 = por %p135, %p136
      %s139 = sadd.s32 %s138, 1
      %p142 = scmp.eq.s32.totalorder %s14, 1
      %p143 = scmp.ne.s32.totalorder %s138, %s140
      %p144 = scmp.eq.s32.totalorder %s14, 0
      %p145 = por %p143, %p144
      %p146 = scmp.ne.s32.totalorder %s138, %s140
      %p147 = scmp.eq.s32.totalorder %s19, 1
      %p148 = por %p146, %p147
      %p149 = scmp.ne.s32.totalorder %s140, %s141
      %p150 = scmp.eq.s32.totalorder %s19, 0
      %p151 = por %p149, %p150
      %p152 = scmp.ne.s32.totalorder %s140, %s141
      %p153 = scmp.eq.s32.totalorder %s20, 1
      %p154 = por %p152, %p153
      %p156 = scmp.ne.s32.totalorder %s141, %s155
      %p157 = scmp.eq.s32.totalorder %s20, 0
      %p158 = por %p156, %p157
      %s159 = ssub.s32 %s21, %s33
      %p160 = scmp.eq.s32.totalorder %s159, 0
      %s162 = sadd.s32 %s161, 1
      %s163 = scalar_select %p160, %s161, %s162
      %p166 = pneg %p160
      %p167 = scmp.eq.s32.totalorder %s14, 1
      %p168 = por %p166, %p167
      %p169 = scmp.ne.s32.totalorder %s161, %s164
      %p170 = scmp.eq.s32.totalorder %s14, 0
      %p171 = por %p169, %p170
      %p172 = scmp.ne.s32.totalorder %s161, %s164
      %p173 = scmp.eq.s32.totalorder %s19, 1
      %p174 = por %p172, %p173
      %p175 = scmp.ne.s32.totalorder %s164, %s165
      %p176 = scmp.eq.s32.totalorder %s19, 0
      %p177 = por %p175, %p176
      %p178 = scmp.ne.s32.totalorder %s164, %s165
      %p179 = scmp.eq.s32.totalorder %s20, 1
      %p180 = por %p178, %p179
      %p182 = scmp.ne.s32.totalorder %s165, %s181
      %p183 = scmp.eq.s32.totalorder %s20, 0
      %p184 = por %p182, %p183
      %p185 = scmp.le.s32.totalorder 1, %s14
      %p186 = scmp.lt.s32.totalorder %s14, 3
      %p187 = pnand %p185, %p186
      %p188 = pneg %p187
      // Predicated region
      $region9: #{tpu_custom_call.1} parent=5 // pred_check
        _
      $region10: #{tpu_custom_call.1} parent=5 // pred_check_branch
        %190 = sbr.rel (%p187) target = $region12
      $region11: #{tpu_custom_call.1} parent=5 // pred_region
        %s191 = ssub.s32 %s14, 1
        // Predicated region
        $region13: #{tpu_custom_call.1} parent=11 // pred_check
          %p192 = pneg %p78
        $region14: #{tpu_custom_call.1} parent=11 // pred_check_branch
          %194 = sbr.rel (%p192) target = $region16
        $region15: #{tpu_custom_call.1} parent=11 // pred_region
          %p195 = scmp.lt.s32.totalorder %s24, 0
          %s196 = scalar_select %p195, %s24, 0
          %s197 = smul.addr %s196, 4
          %s198 = scalar_lea.vmem %s1, %s197
        $region16: #{tpu_custom_call.1} parent=11 // pred_fallthru
          _
        // Predicated region
        $region17: #{tpu_custom_call.1} parent=11 // pred_check
          %p199 = pneg %p104
        $region18: #{tpu_custom_call.1} parent=11 // pred_check_branch
          %201 = sbr.rel (%p199) target = $region20
        $region19: #{tpu_custom_call.1} parent=11 // pred_region
          %p202 = scmp.lt.s32.totalorder %s24, 0
          %s203 = scalar_select %p202, %s24, 0
          %s204 = scalar_lea.vmem %s2, %s203
        $region20: #{tpu_custom_call.1} parent=11 // pred_fallthru
          _
        // Predicated region
        $region21: #{tpu_custom_call.1} parent=11 // pred_check
          %p205 = pneg %p130
        $region22: #{tpu_custom_call.1} parent=11 // pred_check_branch
          %207 = sbr.rel (%p205) target = $region24
        $region23: #{tpu_custom_call.1} parent=11 // pred_region
          %s208 = smul.u32 16, %s24
          %p209 = scmp.lt.s32.totalorder %s208, 15
          %s210 = scalar_select %p209, %s208, 15
          %s211 = smul.addr %s210, 4
          %s212 = scalar_lea.vmem %s3, %s211
          %s213 = smul.u32 16, %s24
        $region24: #{tpu_custom_call.1} parent=11 // pred_fallthru
          _
        // Predicated region
        $region25: #{tpu_custom_call.1} parent=11 // pred_check
          %p214 = pneg %p151
        $region26: #{tpu_custom_call.1} parent=11 // pred_check_branch
          %216 = sbr.rel (%p214) target = $region28
        $region27: #{tpu_custom_call.1} parent=11 // pred_region
          _
        $region28: #{tpu_custom_call.1} parent=11 // pred_fallthru
          _
      $region12: #{tpu_custom_call.1} parent=5 // pred_fallthru
        _
      %p217 = scmp.lt.s32.totalorder %s14, 2
      // Predicated region
      $region29: #{tpu_custom_call.1} parent=5 // pred_check
        %p218 = pneg %p217
      $region30: #{tpu_custom_call.1} parent=5 // pred_check_branch
        %220 = sbr.rel (%p218) target = $region32
      $region31: #{tpu_custom_call.1} parent=5 // pred_region
        // Predicated region
        $region33: #{tpu_custom_call.1} parent=31 // pred_check
          %p221 = pneg %p46
        $region34: #{tpu_custom_call.1} parent=31 // pred_check_branch
          %223 = sbr.rel (%p221) target = $region36
        $region35: #{tpu_custom_call.1} parent=31 // pred_region
          %p224 = scmp.lt.s32.totalorder %s21, 1
          %s225 = scalar_select %p224, %s21, 1
          %s226 = smul.addr %s225, 8
          %s227 = scalar_lea.vmem %s0, %s226
        $region36: #{tpu_custom_call.1} parent=31 // pred_fallthru
          _
      $region32: #{tpu_custom_call.1} parent=5 // pred_fallthru
        _
      %p228 = scmp.le.s32.totalorder 1, %s14
      %p229 = scmp.lt.s32.totalorder %s14, 3
      %p230 = pnand %p228, %p229
      %p231 = pneg %p230
      // Predicated region
      $region37: #{tpu_custom_call.1} parent=5 // pred_check
        _
      $region38: #{tpu_custom_call.1} parent=5 // pred_check_branch
        %233 = sbr.rel (%p230) target = $region40
      $region39: #{tpu_custom_call.1} parent=5 // pred_region
        %s234 = ssub.s32 %s14, 1
        %p235 = scmp.lt.s32.totalorder %s23, 1
        %s236 = scalar_select %p235, %s23, 1
        %s237 = smul.addr %s236, 8
        %s238 = scalar_lea.vmem %s0, %s237
        %p239 = pneg %p52
        %p240 = pneg %p49
        %p241 = scmp.lt.s32.totalorder %s24, 0
        %s242 = scalar_select %p241, %s24, 0
        %s243 = smul.addr %s242, 4
        %s244 = scalar_lea.vmem %s1, %s243
        %p245 = pneg %p78
        %p246 = pneg %p75
        %p247 = scmp.lt.s32.totalorder %s24, 0
        %s248 = scalar_select %p247, %s24, 0
        %s249 = scalar_lea.vmem %s2, %s248
        %p250 = pneg %p104
        %p251 = pneg %p101
        %s252 = smul.u32 16, %s24
        %p253 = scmp.lt.s32.totalorder %s252, 15
        %s254 = scalar_select %p253, %s252, 15
        %s255 = smul.addr %s254, 4
        %s256 = scalar_lea.vmem %s3, %s255
        %p257 = pneg %p130
        %p258 = pneg %p127
        %p259 = pneg %p151
        %p260 = pneg %p148
        %p261 = pneg %p177
        %p262 = pneg %p174
        %s263 = sand.u32 %s164, 1
        %s264 = scalar_lea.sflag [#allocation4], %s263
        %s265 = sand.u32 %s164, 1
        %s266 = smul.addr %s265, 8
        %s267 = scalar_lea.vmem [#allocation3], %s266
        %p268 = scmp.lt.s32.totalorder %s23, 1
        %s269 = scalar_select %p268, %s23, 1
        %s270 = smul.addr %s269, 8
        %s271 = scalar_lea.vmem %s0, %s270
        %p272 = scmp.lt.s32.totalorder %s24, 0
        %s273 = scalar_select %p272, %s24, 0
        %s274 = smul.addr %s273, 4
        %s275 = scalar_lea.vmem %s1, %s274
        %p276 = scmp.lt.s32.totalorder %s24, 0
        %s277 = scalar_select %p276, %s24, 0
        %s278 = scalar_lea.vmem %s2, %s277
        %s279 = smul.u32 16, %s24
        %p280 = scmp.lt.s32.totalorder %s279, 15
        %s281 = scalar_select %p280, %s279, 15
        %s282 = smul.addr %s281, 4
        %s283 = scalar_lea.vmem %s3, %s282
        %s284 = smul.u32 16, %s24
        %p290 = scmp.eq.s32.totalorder %s24, 0
        // Predicated region
        $region41: #{tpu_custom_call.1} parent=39 // pred_check
          %p291 = pneg %p290
        $region42: #{tpu_custom_call.1} parent=39 // pred_check_branch
          %293 = sbr.rel (%p291) target = $region44
        $region43: #{tpu_custom_call.1} parent=39 // pred_region
          %v294 = vld [vmem:[%s271] sm:$0xff]
          %v295 = vpack.c.bf16 %v294, %v294
          %vm296 = vcmask 257024
          %297 = vst.msk [vmem:[#allocation2] sm:$0xf] %vm296, %v295
          %v298 = vld [vmem:[%s4] sm:$0x1]
          %v300 = vlaneseq
          %v301 = vshrl.u32 %v300, 7
          %v302 = vsub.s32 0, %v301
          %v303 = vrot.slane %v298, %v302
          %vm305 = vcmask 261120
          %306 = vst.msk [vmem:[%s267] sm:$0xff] %vm305, %v303
        $region44: #{tpu_custom_call.1} parent=39 // pred_fallthru
          _
        %v307 = vld [vmem:[#allocation2] sm:$0xf]
        %v308 = vld [vmem:[%s275] sm:$0xf]
        %v309 = vld [vmem:[%s275 + $0x4] sm:$0xf]
        %v310 = vld [vmem:[%s275 + $0x8] sm:$0xf]
        %v311 = vld [vmem:[%s275 + $0xc] sm:$0xf]
        %v312 = vld [vmem:[%s278] sm:$0x1]
        %v314 = vlaneseq
        %v315 = vshrl.u32 %v314, 7
        %v316 = vsub.s32 0, %v315
        %v317 = vrot.slane %v312, %v316
        %v323 = vunpack.c.l.b16 %v308
        %v324 = vunpack.c.l.b16 %v309
        %v325 = vunpack.c.l.b16 %v310
        %v326 = vunpack.c.l.b16 %v311
        %v327 = vpack.c.b16 %v324, %v323
        %v328 = vpack.c.b16 %v326, %v325
        %vm331 = vcmask 261120
        %v333 = vsel %vm331, %v307, 0
        %335 = vmatprep.subr.bf16.mxu0 0
        %336 = vmatpush1.bf16.msra.mxu0 %v327
        %337 = vmatprep.subr.bf16.mxu0 0
        %338 = vmatpush1.bf16.msra.mxu0 %v328
        %339 = vmatprep.subr.bf16.mxu0 0
        %340 = vmatpush1.bf16.msra.mxu0 0
        %341 = vmatprep.subr.bf16.mxu0 0
        %342 = vmatpush1.bf16.msra.mxu0 0
        %343 = vmatprep.subr.bf16.mxu0 0
        %344 = vmatpush1.bf16.msra.mxu0 0
        %345 = vmatprep.subr.bf16.mxu0 0
        %346 = vmatpush1.bf16.msra.mxu0 0
        %347 = vmatprep.subr.bf16.mxu0 0
        %348 = vmatpush1.bf16.msra.mxu0 0
        %349 = vmatprep.subr.bf16.mxu0 0
        %350 = vmatpush1.bf16.msra.mxu0 0
        %351 = vmatprep.subr.bf16.mxu0 0
        %352 = vmatpush1.bf16.msra.mxu0 0
        %353 = vmatprep.subr.bf16.mxu0 0
        %354 = vmatpush1.bf16.msra.mxu0 0
        %355 = vmatprep.subr.bf16.mxu0 0
        %356 = vmatpush1.bf16.msra.mxu0 0
        %357 = vmatprep.subr.bf16.mxu0 0
        %358 = vmatpush1.bf16.msra.mxu0 0
        %359 = vmatprep.subr.bf16.mxu0 0
        %360 = vmatpush1.bf16.msra.mxu0 0
        %361 = vmatprep.subr.bf16.mxu0 0
        %362 = vmatpush1.bf16.msra.mxu0 0
        %363 = vmatprep.subr.bf16.mxu0 0
        %364 = vmatpush1.bf16.msra.mxu0 0
        %365 = vmatprep.subr.bf16.mxu0 0
        %366 = vmatpush1.bf16.msra.mxu0 0
        %367 = vmatprep.mubr.bf16.mxu0 0
        %368 = vmatmul.mubr.bf16.gmra.mrb[0].mxu0 %v333
        %v369 = vpop.f32.mrb[0].mxu0
        %v370 = vadd.f32 %v317, %v369
        %v371 = vpop.f32.mrb[0].mxu0
        %v372 = vpop.f32.mrb[0].mxu0
        %v373 = vpop.f32.mrb[0].mxu0
        %374 = vdwg.mxu0
        %v375 = vpack.c.bf16 %v370, %v370
        %v376 = vmul.bf16 %v375, 1056980736
        %v377 = vmul.bf16 %v375, 1027030327
        %v378 = vmul.bf16 %v377, %v375
        %v379 = vmul.bf16 %v378, %v375
        %v380 = vadd.bf16 %v375, %v379
        %v381 = vmul.bf16 %v380, 1061961548
        %v382 = vtanh.bf16.pop %v381
        %v383 = vadd.bf16 %v382, 1065369472
        %v384 = vmul.bf16 %v376, %v383
        %v385 = vld [vmem:[%s267] sm:$0xff]
        %v386 = vld [vmem:[%s283] sm:$0xf]
        %v387 = vld [vmem:[%s283 + $0x4] sm:$0xf]
        %v388 = vld [vmem:[%s283 + $0x8] sm:$0xf]
        %v389 = vld [vmem:[%s283 + $0xc] sm:$0xf]
        %v390 = vld [vmem:[%s283 + $0x10] sm:$0xf]
        %v391 = vld [vmem:[%s283 + $0x14] sm:$0xf]
        %v392 = vld [vmem:[%s283 + $0x18] sm:$0xf]
        %v393 = vld [vmem:[%s283 + $0x1c] sm:$0xf]
        %v394 = vld [vmem:[%s283 + $0x20] sm:$0xf]
        %v395 = vld [vmem:[%s283 + $0x24] sm:$0xf]
        %v396 = vld [vmem:[%s283 + $0x28] sm:$0xf]
        %v397 = vld [vmem:[%s283 + $0x2c] sm:$0xf]
        %v398 = vld [vmem:[%s283 + $0x30] sm:$0xf]
        %v399 = vld [vmem:[%s283 + $0x34] sm:$0xf]
        %v400 = vld [vmem:[%s283 + $0x38] sm:$0xf]
        %v401 = vld [vmem:[%s283 + $0x3c] sm:$0xf]
        %v418 = vunpack.c.l.b16 %v386
        %v419 = vunpack.c.l.b16 %v387
        %v420 = vunpack.c.l.b16 %v388
        %v421 = vunpack.c.l.b16 %v389
        %v422 = vunpack.c.l.b16 %v390
        %v423 = vunpack.c.l.b16 %v391
        %v424 = vunpack.c.l.b16 %v392
        %v425 = vunpack.c.l.b16 %v393
        %v426 = vunpack.c.l.b16 %v394
        %v427 = vunpack.c.l.b16 %v395
        %v428 = vunpack.c.l.b16 %v396
        %v429 = vunpack.c.l.b16 %v397
        %v430 = vunpack.c.l.b16 %v398
        %v431 = vunpack.c.l.b16 %v399
        %v432 = vunpack.c.l.b16 %v400
        %v433 = vunpack.c.l.b16 %v401
        %v434 = vpack.c.b16 %v419, %v418
        %v435 = vpack.c.b16 %v421, %v420
        %v436 = vpack.c.b16 %v423, %v422
        %v437 = vpack.c.b16 %v425, %v424
        %v438 = vpack.c.b16 %v427, %v426
        %v439 = vpack.c.b16 %v429, %v428
        %v440 = vpack.c.b16 %v431, %v430
        %v441 = vpack.c.b16 %v433, %v432
        %450 = vmatprep.subr.bf16.mxu0 0
        %451 = vmatpush1.bf16.msra.mxu0 %v434
        %452 = vmatprep.subr.bf16.mxu0 0
        %453 = vmatpush1.bf16.msra.mxu0 %v435
        %454 = vmatprep.subr.bf16.mxu0 0
        %455 = vmatpush1.bf16.msra.mxu0 %v436
        %456 = vmatprep.subr.bf16.mxu0 0
        %457 = vmatpush1.bf16.msra.mxu0 %v437
        %458 = vmatprep.subr.bf16.mxu0 0
        %459 = vmatpush1.bf16.msra.mxu0 %v438
        %460 = vmatprep.subr.bf16.mxu0 0
        %461 = vmatpush1.bf16.msra.mxu0 %v439
        %462 = vmatprep.subr.bf16.mxu0 0
        %463 = vmatpush1.bf16.msra.mxu0 %v440
        %464 = vmatprep.subr.bf16.mxu0 0
        %465 = vmatpush1.bf16.msra.mxu0 %v441
        %466 = vmatprep.subr.bf16.mxu0 0
        %467 = vmatpush1.bf16.msra.mxu0 0
        %468 = vmatprep.subr.bf16.mxu0 0
        %469 = vmatpush1.bf16.msra.mxu0 0
        %470 = vmatprep.subr.bf16.mxu0 0
        %471 = vmatpush1.bf16.msra.mxu0 0
        %472 = vmatprep.subr.bf16.mxu0 0
        %473 = vmatpush1.bf16.msra.mxu0 0
        %474 = vmatprep.subr.bf16.mxu0 0
        %475 = vmatpush1.bf16.msra.mxu0 0
        %476 = vmatprep.subr.bf16.mxu0 0
        %477 = vmatpush1.bf16.msra.mxu0 0
        %478 = vmatprep.subr.bf16.mxu0 0
        %479 = vmatpush1.bf16.msra.mxu0 0
        %480 = vmatprep.subr.bf16.mxu0 0
        %481 = vmatpush1.bf16.msra.mxu0 0
        %482 = vmatprep.mubr.bf16.mxu0 0
        %483 = vmatmul.mubr.bf16.gmra.mrb[0].mxu0 %v384
        %v484 = vpop.f32.mrb[0].mxu0
        %v485 = vadd.f32 0.0, %v484
        %v486 = vpop.f32.mrb[0].mxu0
        %v487 = vpop.f32.mrb[0].mxu0
        %v488 = vpop.f32.mrb[0].mxu0
        %489 = vdwg.mxu0
        %v490 = vadd.f32 %v385, %v485
        %491 = vst.msk [vmem:[%s267] sm:$0xff] %vm331, %v490
        %s492 = sand.u32 %s164, 1
        %s493 = scalar_lea.sflag [#allocation4], %s492
        %s494 = sand.u32 %s164, 1
        %s495 = smul.addr %s494, 8
        %s496 = scalar_lea.vmem [#allocation3], %s495
        // Predicated region
        $region45: #{tpu_custom_call.1} parent=39 // pred_check
          %p497 = pneg %p174
        $region46: #{tpu_custom_call.1} parent=39 // pred_check_branch
          %499 = sbr.rel (%p497) target = $region48
        $region47: #{tpu_custom_call.1} parent=39 // pred_region
          %s501 = ssub.s32 128, 128
          %502 = vsyncadd %s493, %s501
          %s503 = smul.addr %s23, 128
          %s504 = scalar_lea.hbm %s5, %s503
          %s506 = sshll.u32 %s496, 4
          %s507 = int_to_ptr.vmem [resolvable:$true] %s506
          %509 = dma.vmem_to_hbm [thread:$0]  %s507, 128, %s504, %s493
        $region48: #{tpu_custom_call.1} parent=39 // pred_fallthru
          _
      $region40: #{tpu_custom_call.1} parent=5 // pred_fallthru
        _
      %p510 = scmp.le.s32.totalorder 2, %s14
      // Predicated region
      $region49: #{tpu_custom_call.1} parent=5 // pred_check
        %p511 = pneg %p510
      $region50: #{tpu_custom_call.1} parent=5 // pred_check_branch
        %513 = sbr.rel (%p511) target = $region52
      $region51: #{tpu_custom_call.1} parent=5 // pred_region
        %s514 = ssub.s32 %s14, 2
        // Predicated region
        $region53: #{tpu_custom_call.1} parent=51 // pred_check
          %p515 = pneg %p180
        $region54: #{tpu_custom_call.1} parent=51 // pred_check_branch
          %517 = sbr.rel (%p515) target = $region56
        $region55: #{tpu_custom_call.1} parent=51 // pred_region
          %s518 = sand.u32 %s165, 1
          %s519 = scalar_lea.sflag [#allocation4], %s518
          %s520 = sand.u32 %s165, 1
          %s521 = smul.addr %s520, 8
          %s522 = scalar_lea.vmem [#allocation3], %s521
          %523 = dma.done %s519, 128
        $region56: #{tpu_custom_call.1} parent=51 // pred_fallthru
          _
      $region52: #{tpu_custom_call.1} parent=5 // pred_fallthru
        _
    $region6: #{tpu_custom_call.1} parent=1 // loop_footer
      %s18 = sadd.s32 1, %s14
    $region7: #{tpu_custom_call.1} parent=1 // loop_footer_branch
      %13 = sbr.rel target = $region3
    $region8: #{tpu_custom_call.1} parent=1 // loop_exit
      _
    %524 = vsyncpa [#allocation4], 1
    %s525 = scalar_lea.sflag [#allocation4], 1
    %526 = vsyncpa %s525, 1

</llo_original>
